<compile_context>
chip_gen: v7x
topology: tpu7x:2x2x1
jax: 0.10.0
libtpu: 0.0.40
codegen_flags: <defaults>
</compile_context>

<pallas_src>
import jax
import jax.numpy as jnp
from jax.experimental import pallas as pl
from jax.experimental.pallas import tpu as pltpu


def _sam_kernel(w_ref, b_ref, x_ref, o_ref):
    """Fused 1x1-conv(+BN) -> sigmoid -> gate.

    w_ref: (C, C)   folded conv*BN weight (resident in VMEM across the grid)
    b_ref: (C, 1)   folded bias
    x_ref: (1, C, TS) tile of x viewed as (N, C, H*W)
    o_ref: (1, C, TS) output tile
    """
    x = x_ref[0]                                                  # (C, TS)
    # Channel contraction on the MXU; accumulate in f32.
    a = jnp.dot(w_ref[...], x.astype(w_ref.dtype),
                preferred_element_type=jnp.float32)               # (C, TS)
    a = a + b_ref[...]                                            # bias bcast
    # logistic activation (numerically safe: exp(-a) saturates to 0/inf).
    attn = 1.0 / (1.0 + jnp.exp(-a))
    o_ref[0] = (attn * x.astype(jnp.float32)).astype(o_ref.dtype)


def yolo_sam_forward(x, conv_w, bn_gamma, bn_beta, bn_mean, bn_var,
                     *, eps=1e-5, spatial_tile=None):
    """JAX/Pallas equivalent of YOLO_SAM_Module.forward (eval-mode BN)."""
    N, C, H, W = x.shape
    Co, Ci, kh, kw = conv_w.shape
    assert kh == 1 and kw == 1, "SAM module uses a 1x1 conv"
    assert Ci == C and Co == C, "SAM gate requires out_channels == in_channels"
    S = H * W

    # ---- Fold BatchNorm into the 1x1 conv (host side, tiny arrays). -------
    scale = bn_gamma / jnp.sqrt(bn_var + eps)                     # (C,)
    w_f = (conv_w.reshape(Co, Ci) * scale[:, None]).astype(jnp.float32)
    b_f = (bn_beta - bn_mean * scale).astype(jnp.float32).reshape(C, 1)

    # ---- Lane-dense view: (N, C, H*W); spatial is the 128-lane axis. ------
    x3 = x.reshape(N, C, S)

    # ---- Pick a spatial tile: multiple of 128 dividing S, x-tile <= ~2 MiB
    #      so (in + out) * double-buffer stays well under scoped VMEM on all
    #      generations (including v7x's 64 MiB physical VMEM).
    if spatial_tile is None:
        budget_bytes = 2 * 1024 * 1024
        ts = S
        if S % 128 == 0:
            cands = [t for t in range(128, S + 1, 128)
                     if S % t == 0 and C * t * x.dtype.itemsize <= budget_bytes]
            if cands:
                ts = max(cands)
    else:
        ts = spatial_tile
    assert S % ts == 0, f"spatial tile {ts} must divide H*W={S}"

    grid = (N, S // ts)

    out = pl.pallas_call(
        _sam_kernel,
        out_shape=jax.ShapeDtypeStruct((N, C, S), x.dtype),
        grid_spec=pltpu.PrefetchScalarGridSpec(
            num_scalar_prefetch=0,
            grid=grid,
            in_specs=[
                # Folded weight / bias: constant block index -> fetched once,
                # stays resident in VMEM for the whole grid.
                pl.BlockSpec((C, C), lambda n, s: (0, 0)),
                pl.BlockSpec((C, 1), lambda n, s: (0, 0)),
                # x tile: one batch element, all channels, a lane-dense
                # spatial slab.  Auto double-buffered by Pallas.
                pl.BlockSpec((1, C, ts), lambda n, s: (n, 0, s)),
            ],
            out_specs=pl.BlockSpec((1, C, ts), lambda n, s: (n, 0, s)),
        ),
        compiler_params=pltpu.CompilerParams(
            # Both grid axes are independent -> megacore sharding on v7x.
            dimension_semantics=("parallel", "parallel"),
        ),
    )(w_f, b_f, x3)

    return out.reshape(N, C, H, W)


def _reference(x, conv_w, bn_gamma, bn_beta, bn_mean, bn_var, eps=1e-5):
    """Pure-JAX reference mirroring the PyTorch forward (eval-mode BN)."""
    N, C, H, W = x.shape
    y = jnp.einsum("oi,nihw->nohw", conv_w.reshape(C, C), x,
                   precision=jax.lax.Precision.HIGHEST)
    scale = bn_gamma / jnp.sqrt(bn_var + eps)
    y = (y - bn_mean[None, :, None, None]) * scale[None, :, None, None] \
        + bn_beta[None, :, None, None]
    return jax.nn.sigmoid(y) * x


if __name__ == "__main__":
    key = jax.random.PRNGKey(0)
    kx, kw, kg, kb = jax.random.split(key, 4)

    N, C, H, W = 2, 4, 16, 16
    x = jax.random.normal(kx, (N, C, H, W), dtype=jnp.float32)
    conv_w = jax.random.normal(kw, (C, C, 1, 1), dtype=jnp.float32) * (1.0 / jnp.sqrt(C))
    bn_gamma = 1.0 + 0.1 * jax.random.normal(kg, (C,), dtype=jnp.float32)
    bn_beta = 0.1 * jax.random.normal(kb, (C,), dtype=jnp.float32)
    bn_mean = 0.05 * jnp.arange(C, dtype=jnp.float32)
    bn_var = 1.0 + 0.1 * jnp.arange(C, dtype=jnp.float32)

    out = yolo_sam_forward(x, conv_w, bn_gamma, bn_beta, bn_mean, bn_var)
    out = jax.block_until_ready(out)

    ref = jax.block_until_ready(
        _reference(x, conv_w, bn_gamma, bn_beta, bn_mean, bn_var))

    assert out.shape == x.shape and out.dtype == x.dtype
    max_err = float(jnp.max(jnp.abs(out - ref)))
    # Tolerance covers default-precision MXU f32 matmul vs HIGHEST-precision
    # XLA reference; structure/semantics are identical.
    assert max_err < 2e-2, f"mismatch vs reference: max_err={max_err}"

    print("KERNEL_OK")
</pallas_src>

<mosaic_0001>
module attributes {stable_mosaic.version = 11 : i64} {
  func.func @_sam_kernel(%arg0: i32, %arg1: i32, %arg2: memref<4x4xf32, #tpu.memory_space<vmem>>, %arg3: memref<4x1xf32, #tpu.memory_space<vmem>>, %arg4: memref<1x4x256xf32, #tpu.memory_space<vmem>>, %arg5: memref<1x4x256xf32, #tpu.memory_space<vmem>>) attributes {dimension_semantics = [#tpu.dimension_semantics<parallel>, #tpu.dimension_semantics<parallel>], iteration_bounds = array<i64: 2, 1>, scalar_prefetch = 0 : i64, scratch_operands = 0 : i64, tpu.core_type = #tpu.core_type<tc>, window_params = [{pipeline_mode = #tpu.pipeline_mode<synchronous>, transform_indices = @transform_0, window_bounds = array<i64: 4, 4>}, {pipeline_mode = #tpu.pipeline_mode<synchronous>, transform_indices = @transform_1, window_bounds = array<i64: 4, 1>}, {transform_indices = @transform_2, window_bounds = array<i64: 1, 4, 256>}, {transform_indices = @transform_3, window_bounds = array<i64: 1, 4, 256>}]} {
    %c0 = arith.constant 0 : index
    %c0_0 = arith.constant 0 : index
    %c0_1 = arith.constant 0 : index
    %0 = vector.load %arg4[%c0, %c0_0, %c0_1] : memref<1x4x256xf32, #tpu.memory_space<vmem>>, vector<1x4x256xf32>
    %1 = vector.shape_cast %0 : vector<1x4x256xf32> to vector<4x256xf32>
    %c0_2 = arith.constant 0 : index
    %c0_3 = arith.constant 0 : index
    %2 = vector.load %arg2[%c0_2, %c0_3] : memref<4x4xf32, #tpu.memory_space<vmem>>, vector<4x4xf32>
    %cst = arith.constant dense<0.000000e+00> : vector<4x256xf32>
    %3 = tpu.matmul %2, %1, %cst {dimension_numbers = #tpu.dot_dimension_numbers<[1], [0], [0], [1], [0, 0, 1, 1], [], []>} : vector<4x4xf32>, vector<4x256xf32>, vector<4x256xf32> -> vector<4x256xf32>
    %c0_4 = arith.constant 0 : index
    %c0_5 = arith.constant 0 : index
    %4 = vector.load %arg3[%c0_4, %c0_5] : memref<4x1xf32, #tpu.memory_space<vmem>>, vector<4x1xf32>
    %5 = vector.broadcast %4 : vector<4x1xf32> to vector<4x256xf32>
    %6 = arith.addf %3, %5 : vector<4x256xf32>
    %cst_6 = arith.constant 0.000000e+00 : f32
    %7 = vector.broadcast %cst_6 : f32 to vector<4x256xf32>
    %8 = arith.subf %7, %6 : vector<4x256xf32>
    %9 = math.exp %8 : vector<4x256xf32>
    %cst_7 = arith.constant 1.000000e+00 : f32
    %10 = vector.broadcast %cst_7 : f32 to vector<4x256xf32>
    %11 = arith.addf %10, %9 : vector<4x256xf32>
    %cst_8 = arith.constant 1.000000e+00 : f32
    %12 = vector.broadcast %cst_8 : f32 to vector<4x256xf32>
    %13 = arith.divf %12, %11 : vector<4x256xf32>
    %14 = arith.mulf %13, %1 : vector<4x256xf32>
    %c0_9 = arith.constant 0 : index
    %c0_10 = arith.constant 0 : index
    %c0_11 = arith.constant 0 : index
    %15 = vector.load %arg5[%c0_9, %c0_10, %c0_11] : memref<1x4x256xf32, #tpu.memory_space<vmem>>, vector<1x4x256xf32>
    %16 = vector.shape_cast %15 : vector<1x4x256xf32> to vector<4x256xf32>
    %17 = vector.shape_cast %14 : vector<4x256xf32> to vector<1x4x256xf32>
    tpu.vector_store %arg5[%c0_9, %c0_10, %c0_11], %17 {strides = array<i32>} : memref<1x4x256xf32, #tpu.memory_space<vmem>>, vector<1x4x256xf32>,
    return
  }
  func.func @transform_0(%arg0: i32, %arg1: i32) -> (i32, i32) {
    %c0_i32 = arith.constant 0 : i32
    %c0_i32_0 = arith.constant 0 : i32
    %c0_i32_1 = arith.constant 0 : i32
    return %c0_i32, %c0_i32_0 : i32, i32
  }
  func.func @transform_1(%arg0: i32, %arg1: i32) -> (i32, i32) {
    %c0_i32 = arith.constant 0 : i32
    %c0_i32_0 = arith.constant 0 : i32
    %c0_i32_1 = arith.constant 0 : i32
    return %c0_i32, %c0_i32_0 : i32, i32
  }
  func.func @transform_2(%arg0: i32, %arg1: i32) -> (i32, i32, i32) {
    %c0_i32 = arith.constant 0 : i32
    %c0_i32_0 = arith.constant 0 : i32
    return %arg0, %c0_i32, %arg1 : i32, i32, i32
  }
  func.func @transform_3(%arg0: i32, %arg1: i32) -> (i32, i32, i32) {
    %c0_i32 = arith.constant 0 : i32
    %c0_i32_0 = arith.constant 0 : i32
    return %arg0, %c0_i32, %arg1 : i32, i32, i32
  }
}

</mosaic_0001>

<llo_original>
// kernel: tpu_custom_call.1
$region0: #{tpu_custom_call.1}
  #allocation0 [shape = 'u32[]', space=smem, size = 0x4, offset = 0x4, fixed_abs, tag = 'smem constant byte address 0x4 - core index']
  #allocation1 [shape = 'u32[144,128]{1,0:T(1,128)}', space=vmem, size = 0x12000, scoped, tag = 'internal scratch']
  %s0 = inlined_call_operand.vmem [shape: f32[4,4], index: 0, kind: input, shape index: {}]
  %s1 = inlined_call_operand.vmem [shape: f32[4,1], index: 1, kind: input, shape index: {}]
  %s2 = inlined_call_operand.hbm [shape: f32[2,4,256], index: 2, kind: input, shape index: {}]
  %s3 = inlined_call_operand.hbm [shape: f32[2,4,256], index: 3, kind: output, shape index: {}]
  %s4 = sld [smem:[#allocation0]]
  $region49: #{tpu_custom_call.1} parent=0
    _
  %s6 = ssub.s32 1, %s4
  %s7 = scalar_select 0, %s6, %s4
  $region1: #{tpu_custom_call.1} parent=0
    #allocation2 [shape = 'u8[8192]{0}', space=vmem, size = 0x2000, scoped, tag = 'input window, operand 2']
    #allocation3 [shape = 's32[2]{0}', space=sflag, size = 0x8, scoped, tag = 'scoped memory for tpu_custom_call.1']
    #allocation4 [shape = 's32[2]{0}', space=sflag, size = 0x8, scoped, tag = 'scoped memory for tpu_custom_call.1']
    #allocation5 [shape = 'u8[8192]{0}', space=vmem, size = 0x2000, scoped, tag = 'output window, operand 0']
    %8 = vsyncpa [#allocation3], 0
    %s9 = scalar_lea.sflag [#allocation3], 1
    %10 = vsyncpa %s9, 0
    %11 = vsyncpa [#allocation4], 0
    %s12 = scalar_lea.sflag [#allocation4], 1
    %13 = vsyncpa %s12, 0
    loop: start=0, step=1, limit=4
    $region2: #{tpu_custom_call.1} parent=1 // loop_pre_header
      _
    $region3: #{tpu_custom_call.1} parent=1 // loop_header
      %s15 = sphi 0, %s19
      %p16 = scmp.ge.s32.totalorder %s15, 4
      %s22 = sphi 0, %s34
      %s23 = sphi 0, %s30
      %s24 = sphi 0, %s22
      %s25 = sphi 0, %s23
      %s26 = sphi 0, %s24
      %s27 = sphi 0, %s25
      %s35 = sphi 0, %s35
      %s37 = sphi 0, %s35
      %s38 = sphi 0, %s37
      %s52 = sphi 0, %s38
      %s56 = sphi 0, %s56
      %s58 = sphi 0, %s56
      %s59 = sphi 0, %s58
      %s73 = sphi 0, %s59
      %s81 = sphi 0, %s83
      %s84 = sphi 0, %s81
      %s85 = sphi 0, %s84
      %s101 = sphi 0, %s85
      %s109 = sphi 0, %s111
      %s112 = sphi 0, %s109
      %s113 = sphi 0, %s112
      %s129 = sphi 0, %s113
    $region4: #{tpu_custom_call.1} parent=1 // loop_header_branch
      %18 = sbr.rel (%p16) target = $region8
    $region5: #{tpu_custom_call.1} parent=1 // loop_body
      %s20 = ssub.s32 %s15, 1
      %s21 = ssub.s32 %s15, 2
      %s28 = sadd.s32 1, %s23
      %p29 = scmp.ge.s32.totalorder %s28, 1
      %s30 = scalar_select %p29, 0, %s28
      %s31 = sadd.s32 1, %s22
      %s32 = scalar_select %p29, %s31, %s22
      %p33 = scmp.ge.s32.totalorder %s32, 2
      %s34 = scalar_select %p33, 0, %s32
      %s36 = sadd.s32 %s35, 1
      %p39 = scmp.eq.s32.totalorder %s15, 1
      %p40 = scmp.ne.s32.totalorder %s35, %s37
      %p41 = scmp.eq.s32.totalorder %s15, 0
      %p42 = por %p40, %p41
      %p43 = scmp.ne.s32.totalorder %s35, %s37
      %p44 = scmp.eq.s32.totalorder %s20, 1
      %p45 = por %p43, %p44
      %p46 = scmp.ne.s32.totalorder %s37, %s38
      %p47 = scmp.eq.s32.totalorder %s20, 0
      %p48 = por %p46, %p47
      %p49 = scmp.ne.s32.totalorder %s37, %s38
      %p50 = scmp.eq.s32.totalorder %s21, 1
      %p51 = por %p49, %p50
      %p53 = scmp.ne.s32.totalorder %s38, %s52
      %p54 = scmp.eq.s32.totalorder %s21, 0
      %p55 = por %p53, %p54
      %s57 = sadd.s32 %s56, 1
      %p60 = scmp.eq.s32.totalorder %s15, 1
      %p61 = scmp.ne.s32.totalorder %s56, %s58
      %p62 = scmp.eq.s32.totalorder %s15, 0
      %p63 = por %p61, %p62
      %p64 = scmp.ne.s32.totalorder %s56, %s58
      %p65 = scmp.eq.s32.totalorder %s20, 1
      %p66 = por %p64, %p65
      %p67 = scmp.ne.s32.totalorder %s58, %s59
      %p68 = scmp.eq.s32.totalorder %s20, 0
      %p69 = por %p67, %p68
      %p70 = scmp.ne.s32.totalorder %s58, %s59
      %p71 = scmp.eq.s32.totalorder %s21, 1
      %p72 = por %p70, %p71
      %p74 = scmp.ne.s32.totalorder %s59, %s73
      %p75 = scmp.eq.s32.totalorder %s21, 0
      %p76 = por %p74, %p75
      %s77 = ssub.s32 %s22, %s34
      %s78 = ssub.s32 %s23, %s30
      %s79 = sor.u32 %s77, %s78
      %p80 = scmp.eq.s32.totalorder %s79, 0
      %s82 = sadd.s32 %s81, 1
      %s83 = scalar_select %p80, %s81, %s82
      %p86 = pneg %p80
      %p87 = scmp.eq.s32.totalorder %s15, 1
      %p88 = por %p86, %p87
      %p89 = scmp.ne.s32.totalorder %s81, %s84
      %p90 = scmp.eq.s32.totalorder %s15, 0
      %p91 = por %p89, %p90
      %p92 = scmp.ne.s32.totalorder %s81, %s84
      %p93 = scmp.eq.s32.totalorder %s20, 1
      %p94 = por %p92, %p93
      %p95 = scmp.ne.s32.totalorder %s84, %s85
      %p96 = scmp.eq.s32.totalorder %s20, 0
      %p97 = por %p95, %p96
      %p98 = scmp.ne.s32.totalorder %s84, %s85
      %p99 = scmp.eq.s32.totalorder %s21, 1
      %p100 = por %p98, %p99
      %p102 = scmp.ne.s32.totalorder %s85, %s101
      %p103 = scmp.eq.s32.totalorder %s21, 0
      %p104 = por %p102, %p103
      %s105 = ssub.s32 %s22, %s34
      %s106 = ssub.s32 %s23, %s30
      %s107 = sor.u32 %s105, %s106
      %p108 = scmp.eq.s32.totalorder %s107, 0
      %s110 = sadd.s32 %s109, 1
      %s111 = scalar_select %p108, %s109, %s110
      %p114 = pneg %p108
      %p115 = scmp.eq.s32.totalorder %s15, 1
      %p116 = por %p114, %p115
      %p117 = scmp.ne.s32.totalorder %s109, %s112
      %p118 = scmp.eq.s32.totalorder %s15, 0
      %p119 = por %p117, %p118
      %p120 = scmp.ne.s32.totalorder %s109, %s112
      %p121 = scmp.eq.s32.totalorder %s20, 1
      %p122 = por %p120, %p121
      %p123 = scmp.ne.s32.totalorder %s112, %s113
      %p124 = scmp.eq.s32.totalorder %s20, 0
      %p125 = por %p123, %p124
      %p126 = scmp.ne.s32.totalorder %s112, %s113
      %p127 = scmp.eq.s32.totalorder %s21, 1
      %p128 = por %p126, %p127
      %p130 = scmp.ne.s32.totalorder %s113, %s129
      %p131 = scmp.eq.s32.totalorder %s21, 0
      %p132 = por %p130, %p131
      %p133 = scmp.le.s32.totalorder 1, %s15
      %p134 = scmp.lt.s32.totalorder %s15, 3
      %p135 = pnand %p133, %p134
      %p136 = pneg %p135
      // Predicated region
      $region9: #{tpu_custom_call.1} parent=5 // pred_check
        _
      $region10: #{tpu_custom_call.1} parent=5 // pred_check_branch
        %138 = sbr.rel (%p135) target = $region12
      $region11: #{tpu_custom_call.1} parent=5 // pred_region
        %s139 = ssub.s32 %s15, 1
        // Predicated region
        $region13: #{tpu_custom_call.1} parent=11 // pred_check
          %p140 = pneg %p48
        $region14: #{tpu_custom_call.1} parent=11 // pred_check_branch
          %142 = sbr.rel (%p140) target = $region16
        $region15: #{tpu_custom_call.1} parent=11 // pred_region
          _
        $region16: #{tpu_custom_call.1} parent=11 // pred_fallthru
          _
        // Predicated region
        $region17: #{tpu_custom_call.1} parent=11 // pred_check
          %p143 = pneg %p69
        $region18: #{tpu_custom_call.1} parent=11 // pred_check_branch
          %145 = sbr.rel (%p143) target = $region20
        $region19: #{tpu_custom_call.1} parent=11 // pred_region
          _
        $region20: #{tpu_custom_call.1} parent=11 // pred_fallthru
          _
      $region12: #{tpu_custom_call.1} parent=5 // pred_fallthru
        _
      %p146 = scmp.lt.s32.totalorder %s15, 2
      // Predicated region
      $region21: #{tpu_custom_call.1} parent=5 // pred_check
        %p147 = pneg %p146
      $region22: #{tpu_custom_call.1} parent=5 // pred_check_branch
        %149 = sbr.rel (%p147) target = $region24
      $region23: #{tpu_custom_call.1} parent=5 // pred_region
        // Predicated region
        $region25: #{tpu_custom_call.1} parent=23 // pred_check
          %p150 = pneg %p91
        $region26: #{tpu_custom_call.1} parent=23 // pred_check_branch
          %152 = sbr.rel (%p150) target = $region28
        $region27: #{tpu_custom_call.1} parent=23 // pred_region
          %s153 = sand.u32 %s81, 1
          %s154 = scalar_lea.sflag [#allocation3], %s153
          %s155 = sand.u32 %s81, 1
          %s156 = smul.addr %s155, 8
          %s157 = scalar_lea.vmem [#allocation2], %s156
          %s158 = smul.u32 2, %s23
          %s160 = ssub.s32 128, 128
          %161 = vsyncadd %s154, %s160
          %s162 = smul.addr %s22, 2
          %s163 = sadd.s32 %s158, %s162
          %s164 = smul.addr %s163, 64
          %s165 = scalar_lea.hbm %s2, %s164
          %s167 = sshll.u32 %s157, 4
          %s168 = int_to_ptr.vmem [resolvable:$true] %s167
          %170 = dma.hbm_to_vmem [thread:$0]  %s165, 128, %s168, %s154
        $region28: #{tpu_custom_call.1} parent=23 // pred_fallthru
          _
      $region24: #{tpu_custom_call.1} parent=5 // pred_fallthru
        _
      %p171 = scmp.le.s32.totalorder 1, %s15
      %p172 = scmp.lt.s32.totalorder %s15, 3
      %p173 = pnand %p171, %p172
      %p174 = pneg %p173
      // Predicated region
      $region29: #{tpu_custom_call.1} parent=5 // pred_check
        _
      $region30: #{tpu_custom_call.1} parent=5 // pred_check_branch
        %176 = sbr.rel (%p173) target = $region32
      $region31: #{tpu_custom_call.1} parent=5 // pred_region
        %s177 = ssub.s32 %s15, 1
        %s178 = sand.u32 %s84, 1
        %s179 = scalar_lea.sflag [#allocation3], %s178
        %s180 = sand.u32 %s84, 1
        %s181 = smul.addr %s180, 8
        %s182 = scalar_lea.vmem [#allocation2], %s181
        // Predicated region
        $region33: #{tpu_custom_call.1} parent=31 // pred_check
          %p183 = pneg %p97
        $region34: #{tpu_custom_call.1} parent=31 // pred_check_branch
          %185 = sbr.rel (%p183) target = $region36
        $region35: #{tpu_custom_call.1} parent=31 // pred_region
          %186 = dma.done %s179, 128
        $region36: #{tpu_custom_call.1} parent=31 // pred_fallthru
          _
        %p187 = pneg %p48
        %p188 = pneg %p45
        %p189 = pneg %p69
        %p190 = pneg %p66
        %s191 = sand.u32 %s84, 1
        %s192 = scalar_lea.sflag [#allocation3], %s191
        %s193 = sand.u32 %s84, 1
        %s194 = smul.addr %s193, 8
        %s195 = scalar_lea.vmem [#allocation2], %s194
        %p196 = pneg %p97
        %p197 = pneg %p94
        %p198 = pneg %p125
        %p199 = pneg %p122
        %s200 = sand.u32 %s112, 1
        %s201 = scalar_lea.sflag [#allocation4], %s200
        %s202 = sand.u32 %s112, 1
        %s203 = smul.addr %s202, 8
        %s204 = scalar_lea.vmem [#allocation5], %s203
        %s205 = smul.u32 2, %s25
        %s206 = smul.u32 2, %s25
        %v207 = vld [vmem:[%s182] sm:$0xff]
        %v208 = vld [vmem:[%s0] sm:$0xf]
        %v209 = vld [vmem:[%s1] sm:$0xf]
        %211 = vset.pattern.permute.xlu0 0
        %212 = vperm.xlu0 %211, %v209
        %v213 = vpop.permute.xlu0 %212
        %v216 = vcombine.high %v207, %v207
        %vm217 = vcmask 31744
        %v219 = vsel %vm217, %v208, 0
        %vm221 = vcmask 1043456
        %v222 = vsel %vm221, %v207, 0
        %v224 = vsel %vm221, %v216, 0
        %226 = vmatprep.subr.mxu0 %v224
        %227 = vmatpush1.msra.mxu0 %v222
        %228 = vmatprep.subr.mxu0 0.0
        %229 = vmatpush1.msra.mxu0 0.0
        %230 = vmatprep.subr.mxu0 0.0
        %231 = vmatpush1.msra.mxu0 0.0
        %232 = vmatprep.subr.mxu0 0.0
        %233 = vmatpush1.msra.mxu0 0.0
        %234 = vmatprep.subr.mxu0 0.0
        %235 = vmatpush1.msra.mxu0 0.0
        %236 = vmatprep.subr.mxu0 0.0
        %237 = vmatpush1.msra.mxu0 0.0
        %238 = vmatprep.subr.mxu0 0.0
        %239 = vmatpush1.msra.mxu0 0.0
        %240 = vmatprep.subr.mxu0 0.0
        %241 = vmatpush1.msra.mxu0 0.0
        %242 = vmatprep.subr.mxu0 0.0
        %243 = vmatpush1.msra.mxu0 0.0
        %244 = vmatprep.subr.mxu0 0.0
        %245 = vmatpush1.msra.mxu0 0.0
        %246 = vmatprep.subr.mxu0 0.0
        %247 = vmatpush1.msra.mxu0 0.0
        %248 = vmatprep.subr.mxu0 0.0
        %249 = vmatpush1.msra.mxu0 0.0
        %250 = vmatprep.subr.mxu0 0.0
        %251 = vmatpush1.msra.mxu0 0.0
        %252 = vmatprep.subr.mxu0 0.0
        %253 = vmatpush1.msra.mxu0 0.0
        %254 = vmatprep.subr.mxu0 0.0
        %255 = vmatpush1.msra.mxu0 0.0
        %256 = vmatprep.subr.mxu0 0.0
        %257 = vmatpush1.msra.mxu0 0.0
        %258 = vmatprep.subr.mxu0 0.0
        %259 = vmatpush1.msra.mxu0 0.0
        %260 = vmatprep.subr.mxu0 0.0
        %261 = vmatpush1.msra.mxu0 0.0
        %262 = vmatprep.subr.mxu0 0.0
        %263 = vmatpush1.msra.mxu0 0.0
        %264 = vmatprep.subr.mxu0 0.0
        %265 = vmatpush1.msra.mxu0 0.0
        %266 = vmatprep.subr.mxu0 0.0
        %267 = vmatpush1.msra.mxu0 0.0
        %268 = vmatprep.subr.mxu0 0.0
        %269 = vmatpush1.msra.mxu0 0.0
        %270 = vmatprep.subr.mxu0 0.0
        %271 = vmatpush1.msra.mxu0 0.0
        %272 = vmatprep.subr.mxu0 0.0
        %273 = vmatpush1.msra.mxu0 0.0
        %274 = vmatprep.subr.mxu0 0.0
        %275 = vmatpush1.msra.mxu0 0.0
        %276 = vmatprep.subr.mxu0 0.0
        %277 = vmatpush1.msra.mxu0 0.0
        %278 = vmatprep.subr.mxu0 0.0
        %279 = vmatpush1.msra.mxu0 0.0
        %280 = vmatprep.subr.mxu0 0.0
        %281 = vmatpush1.msra.mxu0 0.0
        %282 = vmatprep.subr.mxu0 0.0
        %283 = vmatpush1.msra.mxu0 0.0
        %284 = vmatprep.subr.mxu0 0.0
        %285 = vmatpush1.msra.mxu0 0.0
        %286 = vmatprep.subr.mxu0 0.0
        %287 = vmatpush1.msra.mxu0 0.0
        %288 = vmatprep.subr.mxu0 0.0
        %289 = vmatpush1.msra.mxu0 0.0
        %290 = vmatprep.mubr.f32.mxu0 0.0
        %291 = vmatmul.mubr.f32.gmra.mrb[0].mxu0 %v219
        %v292 = vpop.f32.mrb[0].mxu0
        %v293 = vadd.f32 %v213, %v292
        %v294 = vpop.f32.mrb[0].mxu0
        %v295 = vadd.f32 %v213, %v294
        %296 = vdwg.mxu0
        %v297 = vsub.f32 0.0, %v293
        %v298 = vsub.f32 0.0, %v295
        %v299 = vmul.f32 %v297, 1.442695
        %v300 = vpow.pop %v299
        %v301 = vmul.f32 %v298, 1.442695
        %v302 = vpow.pop %v301
        %v303 = vadd.f32 %v300, 1.0
        %v304 = vadd.f32 %v302, 1.0
        %v305 = vrcp.pop %v303
        %v306 = vmul.f32 1.0, %v305
        %v307 = vrcp.pop %v304
        %v308 = vmul.f32 1.0, %v307
        %v310 = vmul.f32 %v306, %v207
        %v311 = vmul.f32 %v308, %v216
        %v314 = vcombine.low %v310, %v311
        %316 = vst [vmem:[%s204] sm:$0xff] %v314
        %s317 = sand.u32 %s112, 1
        %s318 = scalar_lea.sflag [#allocation4], %s317
        %s319 = sand.u32 %s112, 1
        %s320 = smul.addr %s319, 8
        %s321 = scalar_lea.vmem [#allocation5], %s320
        // Predicated region
        $region37: #{tpu_custom_call.1} parent=31 // pred_check
          %p322 = pneg %p122
        $region38: #{tpu_custom_call.1} parent=31 // pred_check_branch
          %324 = sbr.rel (%p322) target = $region40
        $region39: #{tpu_custom_call.1} parent=31 // pred_region
          %s325 = smul.u32 2, %s25
          %s327 = ssub.s32 128, 128
          %328 = vsyncadd %s318, %s327
          %s329 = smul.addr %s24, 2
          %s330 = sadd.s32 %s325, %s329
          %s331 = smul.addr %s330, 64
          %s332 = scalar_lea.hbm %s3, %s331
          %s334 = sshll.u32 %s321, 4
          %s335 = int_to_ptr.vmem [resolvable:$true] %s334
          %337 = dma.vmem_to_hbm [thread:$0]  %s335, 128, %s332, %s318
        $region40: #{tpu_custom_call.1} parent=31 // pred_fallthru
          _
      $region32: #{tpu_custom_call.1} parent=5 // pred_fallthru
        _
      %p338 = scmp.le.s32.totalorder 2, %s15
      // Predicated region
      $region41: #{tpu_custom_call.1} parent=5 // pred_check
        %p339 = pneg %p338
      $region42: #{tpu_custom_call.1} parent=5 // pred_check_branch
        %341 = sbr.rel (%p339) target = $region44
      $region43: #{tpu_custom_call.1} parent=5 // pred_region
        %s342 = ssub.s32 %s15, 2
        // Predicated region
        $region45: #{tpu_custom_call.1} parent=43 // pred_check
          %p343 = pneg %p128
        $region46: #{tpu_custom_call.1} parent=43 // pred_check_branch
          %345 = sbr.rel (%p343) target = $region48
        $region47: #{tpu_custom_call.1} parent=43 // pred_region
          %s346 = sand.u32 %s113, 1
          %s347 = scalar_lea.sflag [#allocation4], %s346
          %s348 = sand.u32 %s113, 1
          %s349 = smul.addr %s348, 8
          %s350 = scalar_lea.vmem [#allocation5], %s349
          %351 = dma.done %s347, 128
        $region48: #{tpu_custom_call.1} parent=43 // pred_fallthru
          _
      $region44: #{tpu_custom_call.1} parent=5 // pred_fallthru
        _
    $region6: #{tpu_custom_call.1} parent=1 // loop_footer
      %s19 = sadd.s32 1, %s15
    $region7: #{tpu_custom_call.1} parent=1 // loop_footer_branch
      %14 = sbr.rel target = $region3
    $region8: #{tpu_custom_call.1} parent=1 // loop_exit
      _
    %352 = vsyncpa [#allocation3], 1
    %s353 = scalar_lea.sflag [#allocation3], 1
    %354 = vsyncpa %s353, 1
    %355 = vsyncpa [#allocation4], 1
    %s356 = scalar_lea.sflag [#allocation4], 1
    %357 = vsyncpa %s356, 1

</llo_original>
